<compile_context>
chip_gen: v6e
topology: v6e:2x2x1
jax: 0.10.0
libtpu: 0.0.40
codegen_flags: <defaults>
</compile_context>

<pallas_src>
import jax
import jax.numpy as jnp
from jax import lax
from jax.experimental import pallas as pl
from jax.experimental.pallas import tpu as pltpu

LANES = 128
SUBLANES = 8
ACC_ROWS = 4 * SUBLANES          # (32,128) accumulator -> 4-way vreg add ILP
CHUNK_ROWS = 256                 # rows folded per inner-loop iteration (128 KiB)
MAX_BLOCK_ROWS = 4096            # 2 MiB f32 per input per grid step
VMEM_LIMIT_BYTES = 48 * 1024 * 1024


def _meta(rows):
    """(total_rows, block_rows, num_blocks) for a (rows, 128) slab."""
    block_rows = rows if rows <= MAX_BLOCK_ROWS else MAX_BLOCK_ROWS
    nblocks = pl.cdiv(rows, block_rows)
    return rows, block_rows, nblocks


def _index_map(nblocks, grid_size):
    if nblocks == grid_size:
        return lambda b: (b, 0)
    last = nblocks - 1
    # Clamp: once this input runs out of blocks the block index stays
    # constant, so the pipeline does not re-fetch and the kernel skips
    # accumulation for those steps.
    return lambda b: (jnp.minimum(b, last), 0)


def _fold_chunk(acc_ref, chunk):
    """Add a (rows, 128) f32 chunk into the VMEM accumulator (VPU only)."""
    rows = chunk.shape[0]
    if rows % ACC_ROWS == 0:
        acc_ref[...] += chunk.reshape(-1, ACC_ROWS, LANES).sum(axis=0)
    elif rows % SUBLANES == 0:
        acc_ref[0:SUBLANES, :] += chunk.reshape(-1, SUBLANES, LANES).sum(axis=0)
    else:  # tiny full-array blocks only
        acc_ref[0:1, :] += chunk.sum(axis=0, keepdims=True)


def _accumulate_block(acc_ref, b, meta, grid_size, load):
    """Fold the current block of one input into its accumulator.

    `load(start, n)` reads an (n, 128) f32 chunk from the input ref(s).
    Tail-block rows past the logical array hold Pallas padding (unspecified
    values); they are discarded with a jnp.where *select* -- do not replace
    this with a multiply-by-mask (NaN/garbage would propagate).
    """
    rows, block_rows, nblocks = meta
    tail = nblocks - 1
    tail_rows = rows - tail * block_rows        # valid rows in the tail block
    full_tail = tail_rows == block_rows
    chunked = block_rows > CHUNK_ROWS and block_rows % CHUNK_ROWS == 0

    def fold_block(masked):
        def fold_piece(start, piece_rows):
            chunk = load(start, piece_rows)
            if masked:
                row_ids = start + lax.broadcasted_iota(
                    jnp.int32, (piece_rows, LANES), 0)
                chunk = jnp.where(row_ids < tail_rows, chunk, 0.0)
            _fold_chunk(acc_ref, chunk)

        if chunked:
            # On the masked tail block, only iterate over chunks that contain
            # any valid rows (tail_rows is static).
            n_iter = (pl.cdiv(tail_rows, CHUNK_ROWS) if masked
                      else block_rows // CHUNK_ROWS)

            def body(i, carry):
                start = pl.multiple_of(i * CHUNK_ROWS, CHUNK_ROWS)
                fold_piece(start, CHUNK_ROWS)
                return carry

            lax.fori_loop(0, n_iter, body, 0)
        else:
            fold_piece(0, block_rows)

    if nblocks == grid_size and full_tail:
        fold_block(masked=False)          # fast path: no guards, no masks
        return

    if tail > 0:
        @pl.when(b < tail)
        def _():
            fold_block(masked=False)

    @pl.when(b == tail)                   # b > tail (clamped index) is skipped
    def _():
        fold_block(masked=not full_tail)


def _make_kernel(grid_size, ge_meta, f_meta, s_meta):
    def kernel(gt_ref, enh_ref, first_ref, second_ref,
               abs_out, first_out, second_out,
               abs_acc, first_acc, second_acc):
        b = pl.program_id(0)

        @pl.when(b == 0)
        def _init():
            abs_acc[...] = jnp.zeros_like(abs_acc)
            first_acc[...] = jnp.zeros_like(first_acc)
            second_acc[...] = jnp.zeros_like(second_acc)

        # Chunk loaders read straight from the refs so no block-sized
        # temporaries (e.g. a 2 MiB |gt-enh|) get materialized in VMEM.
        def load_abs(start, n):
            g = gt_ref[pl.ds(start, n), :].astype(jnp.float32)
            e = enh_ref[pl.ds(start, n), :].astype(jnp.float32)
            return jnp.abs(g - e)

        def load_first(start, n):
            return first_ref[pl.ds(start, n), :].astype(jnp.float32)

        def load_second(start, n):
            return second_ref[pl.ds(start, n), :].astype(jnp.float32)

        _accumulate_block(abs_acc, b, ge_meta, grid_size, load_abs)
        _accumulate_block(first_acc, b, f_meta, grid_size, load_first)
        _accumulate_block(second_acc, b, s_meta, grid_size, load_second)

        @pl.when(b == pl.num_programs(0) - 1)
        def _finalize():
            abs_out[0, 0] = jnp.sum(abs_acc[...])
            first_out[0, 0] = jnp.sum(first_acc[...])
            second_out[0, 0] = jnp.sum(second_acc[...])

    return kernel


def _sums_pallas(gt_slab, enh_slab, f_slab, s_slab):
    """Fused sums: sum|gt-enh|, sum(first), sum(second) on (rows,128) slabs."""
    ge_meta = _meta(gt_slab.shape[0])      # gt/enh share geometry
    f_meta = _meta(f_slab.shape[0])
    s_meta = _meta(s_slab.shape[0])
    grid_size = max(ge_meta[2], f_meta[2], s_meta[2])

    def in_spec(meta):
        return pl.BlockSpec((meta[1], LANES), _index_map(meta[2], grid_size))

    scalar_spec = pl.BlockSpec((1, 1), lambda b: (0, 0),
                               memory_space=pltpu.SMEM)
    scalar_shape = jax.ShapeDtypeStruct((1, 1), jnp.float32)

    bytes_accessed = int(gt_slab.size * gt_slab.dtype.itemsize
                         + enh_slab.size * enh_slab.dtype.itemsize
                         + f_slab.size * f_slab.dtype.itemsize
                         + s_slab.size * s_slab.dtype.itemsize + 3 * 4)
    flops = int(3 * gt_slab.size + f_slab.size + s_slab.size)

    abs_sum, first_sum, second_sum = pl.pallas_call(
        _make_kernel(grid_size, ge_meta, f_meta, s_meta),
        out_shape=(scalar_shape, scalar_shape, scalar_shape),
        grid_spec=pltpu.PrefetchScalarGridSpec(
            num_scalar_prefetch=0,
            grid=(grid_size,),
            in_specs=[in_spec(ge_meta), in_spec(ge_meta),
                      in_spec(f_meta), in_spec(s_meta)],
            out_specs=(scalar_spec, scalar_spec, scalar_spec),
            scratch_shapes=[pltpu.VMEM((ACC_ROWS, LANES), jnp.float32)
                            for _ in range(3)],
        ),
        compiler_params=pltpu.CompilerParams(
            dimension_semantics=("arbitrary",),
            vmem_limit_bytes=VMEM_LIMIT_BYTES),
        cost_estimate=pl.CostEstimate(
            flops=flops, transcendentals=0, bytes_accessed=bytes_accessed),
    )(gt_slab, enh_slab, f_slab, s_slab)

    return abs_sum[0, 0], first_sum[0, 0], second_sum[0, 0]


def mctf_loss2(first_loss, second_loss, gt_data, enhanced_data):
    assert gt_data.shape == enhanced_data.shape, "gt/enhanced shapes must match"
    N, C, H, W = gt_data.shape
    num_pixels = N * H * W
    total_gt_elems = N * C * H * W

    lane_aligned = all(int(x.size) % LANES == 0
                       for x in (gt_data, first_loss, second_loss))

    if lane_aligned:
        # Zero-copy lane-dense (rows, 128) views -- no host-side padded copy.
        abs_sum, first_sum, second_sum = _sums_pallas(
            gt_data.reshape(-1, LANES), enhanced_data.reshape(-1, LANES),
            first_loss.reshape(-1, LANES), second_loss.reshape(-1, LANES))
    else:
        # Non-128-aligned sizes: a padded HBM copy would double traffic for a
        # bandwidth-bound reduction, so let XLA's fused reduction handle it
        # (also ~HBM roofline for a pure sum).
        abs_sum = jnp.sum(jnp.abs(gt_data.astype(jnp.float32)
                                  - enhanced_data.astype(jnp.float32)))
        first_sum = jnp.sum(first_loss.astype(jnp.float32))
        second_sum = jnp.sum(second_loss.astype(jnp.float32))

    ground_loss = abs_sum / jnp.float32(total_gt_elems)
    first_sum_loss = first_sum / jnp.float32(num_pixels)
    second_sum_loss = second_sum / jnp.float32(num_pixels)
    return 0.5 * ground_loss + first_sum_loss + second_sum_loss


def _reference(first_loss, second_loss, gt_data, enhanced_data):
    N, C, H, W = gt_data.shape
    num_pixels = N * H * W
    ground = jnp.mean(jnp.abs(gt_data - enhanced_data))
    f = jnp.sum(first_loss) / num_pixels
    s = jnp.sum(second_loss) / num_pixels
    return 0.5 * ground + f + s


if __name__ == "__main__":
    key = jax.random.PRNGKey(0)
    k1, k2, k3, k4 = jax.random.split(key, 4)

    N, C, H, W = 2, 4, 16, 16  # NCHW, matches the PyTorch convention
    gt_data = jax.random.normal(k1, (N, C, H, W), dtype=jnp.float32)
    enhanced_data = jax.random.normal(k2, (N, C, H, W), dtype=jnp.float32)
    first_loss = jax.random.uniform(k3, (N, C, H, W), dtype=jnp.float32)
    second_loss = jax.random.uniform(k4, (N, C, H, W), dtype=jnp.float32)

    loss = mctf_loss2(first_loss, second_loss, gt_data, enhanced_data)
    loss = jax.block_until_ready(loss)

    ref = _reference(first_loss, second_loss, gt_data, enhanced_data)
    assert jnp.allclose(loss, ref, rtol=1e-5, atol=1e-5), (loss, ref)
    print("KERNEL_OK")
</pallas_src>

<mosaic_0001>
module attributes {stable_mosaic.version = 11 : i64} {
  func.func @kernel(%arg0: i32, %arg1: memref<16x128xf32, #tpu.memory_space<vmem>>, %arg2: memref<16x128xf32, #tpu.memory_space<vmem>>, %arg3: memref<16x128xf32, #tpu.memory_space<vmem>>, %arg4: memref<16x128xf32, #tpu.memory_space<vmem>>, %arg5: memref<1x1xf32, #tpu.memory_space<smem>>, %arg6: memref<1x1xf32, #tpu.memory_space<smem>>, %arg7: memref<1x1xf32, #tpu.memory_space<smem>>, %arg8: memref<32x128xf32, #tpu.memory_space<vmem>>, %arg9: memref<32x128xf32, #tpu.memory_space<vmem>>, %arg10: memref<32x128xf32, #tpu.memory_space<vmem>>) attributes {dimension_semantics = [#tpu.dimension_semantics<arbitrary>], iteration_bounds = array<i64: 1>, scalar_prefetch = 0 : i64, scratch_operands = 3 : i64, tpu.core_type = #tpu.core_type<tc>, window_params = [{transform_indices = @transform_0, window_bounds = array<i64: 16, 128>}, {transform_indices = @transform_1, window_bounds = array<i64: 16, 128>}, {transform_indices = @transform_2, window_bounds = array<i64: 16, 128>}, {transform_indices = @transform_3, window_bounds = array<i64: 16, 128>}, {transform_indices = @transform_4, window_bounds = array<i64: 1, 1>}, {transform_indices = @transform_5, window_bounds = array<i64: 1, 1>}, {transform_indices = @transform_6, window_bounds = array<i64: 1, 1>}]} {
    %c0_i32 = arith.constant 0 : i32
    %0 = arith.cmpi eq, %arg0, %c0_i32 : i32
    %1 = arith.extui %0 : i1 to i32
    %c0_i32_0 = arith.constant 0 : i32
    %2 = arith.cmpi ne, %1, %c0_i32_0 : i32
    scf.if %2 {
      %cst_24 = arith.constant 0.000000e+00 : f32
      %27 = vector.broadcast %cst_24 : f32 to vector<32x128xf32>
      %c0_25 = arith.constant 0 : index
      %c0_26 = arith.constant 0 : index
      %28 = vector.load %arg8[%c0_25, %c0_26] : memref<32x128xf32, #tpu.memory_space<vmem>>, vector<32x128xf32>
      tpu.vector_store %arg8[%c0_25, %c0_26], %27 {strides = array<i32>} : memref<32x128xf32, #tpu.memory_space<vmem>>, vector<32x128xf32>,
      %cst_27 = arith.constant 0.000000e+00 : f32
      %29 = vector.broadcast %cst_27 : f32 to vector<32x128xf32>
      %c0_28 = arith.constant 0 : index
      %c0_29 = arith.constant 0 : index
      %30 = vector.load %arg9[%c0_28, %c0_29] : memref<32x128xf32, #tpu.memory_space<vmem>>, vector<32x128xf32>
      tpu.vector_store %arg9[%c0_28, %c0_29], %29 {strides = array<i32>} : memref<32x128xf32, #tpu.memory_space<vmem>>, vector<32x128xf32>,
      %cst_30 = arith.constant 0.000000e+00 : f32
      %31 = vector.broadcast %cst_30 : f32 to vector<32x128xf32>
      %c0_31 = arith.constant 0 : index
      %c0_32 = arith.constant 0 : index
      %32 = vector.load %arg10[%c0_31, %c0_32] : memref<32x128xf32, #tpu.memory_space<vmem>>, vector<32x128xf32>
      tpu.vector_store %arg10[%c0_31, %c0_32], %31 {strides = array<i32>} : memref<32x128xf32, #tpu.memory_space<vmem>>, vector<32x128xf32>,
    } else {
    }
    %c0 = arith.constant 0 : index
    %c0_1 = arith.constant 0 : index
    %3 = vector.load %arg1[%c0, %c0_1] : memref<16x128xf32, #tpu.memory_space<vmem>>, vector<16x128xf32>
    %c0_2 = arith.constant 0 : index
    %c0_3 = arith.constant 0 : index
    %4 = vector.load %arg2[%c0_2, %c0_3] : memref<16x128xf32, #tpu.memory_space<vmem>>, vector<16x128xf32>
    %5 = arith.subf %3, %4 : vector<16x128xf32>
    %6 = math.absf %5 : vector<16x128xf32>
    %c0_4 = arith.constant 0 : index
    %c0_5 = arith.constant 0 : index
    %7 = vector.load %arg8[%c0_4, %c0_5] : memref<32x128xf32, #tpu.memory_space<vmem>>, vector<8x128xf32>
    %8 = vector.shape_cast %6 : vector<16x128xf32> to vector<2x8x128xf32>
    %cst = arith.constant dense<0.000000e+00> : vector<8x128xf32>
    %9 = vector.multi_reduction <add>, %8, %cst [0] : vector<2x8x128xf32> to vector<8x128xf32>
    %10 = arith.addf %7, %9 : vector<8x128xf32>
    %c0_6 = arith.constant 0 : index
    %c0_7 = arith.constant 0 : index
    %11 = vector.load %arg8[%c0_6, %c0_7] : memref<32x128xf32, #tpu.memory_space<vmem>>, vector<8x128xf32>
    tpu.vector_store %arg8[%c0_6, %c0_7], %10 {strides = array<i32>} : memref<32x128xf32, #tpu.memory_space<vmem>>, vector<8x128xf32>,
    %c0_8 = arith.constant 0 : index
    %c0_9 = arith.constant 0 : index
    %12 = vector.load %arg3[%c0_8, %c0_9] : memref<16x128xf32, #tpu.memory_space<vmem>>, vector<16x128xf32>
    %c0_10 = arith.constant 0 : index
    %c0_11 = arith.constant 0 : index
    %13 = vector.load %arg9[%c0_10, %c0_11] : memref<32x128xf32, #tpu.memory_space<vmem>>, vector<8x128xf32>
    %14 = vector.shape_cast %12 : vector<16x128xf32> to vector<2x8x128xf32>
    %cst_12 = arith.constant dense<0.000000e+00> : vector<8x128xf32>
    %15 = vector.multi_reduction <add>, %14, %cst_12 [0] : vector<2x8x128xf32> to vector<8x128xf32>
    %16 = arith.addf %13, %15 : vector<8x128xf32>
    %c0_13 = arith.constant 0 : index
    %c0_14 = arith.constant 0 : index
    %17 = vector.load %arg9[%c0_13, %c0_14] : memref<32x128xf32, #tpu.memory_space<vmem>>, vector<8x128xf32>
    tpu.vector_store %arg9[%c0_13, %c0_14], %16 {strides = array<i32>} : memref<32x128xf32, #tpu.memory_space<vmem>>, vector<8x128xf32>,
    %c0_15 = arith.constant 0 : index
    %c0_16 = arith.constant 0 : index
    %18 = vector.load %arg4[%c0_15, %c0_16] : memref<16x128xf32, #tpu.memory_space<vmem>>, vector<16x128xf32>
    %c0_17 = arith.constant 0 : index
    %c0_18 = arith.constant 0 : index
    %19 = vector.load %arg10[%c0_17, %c0_18] : memref<32x128xf32, #tpu.memory_space<vmem>>, vector<8x128xf32>
    %20 = vector.shape_cast %18 : vector<16x128xf32> to vector<2x8x128xf32>
    %cst_19 = arith.constant dense<0.000000e+00> : vector<8x128xf32>
    %21 = vector.multi_reduction <add>, %20, %cst_19 [0] : vector<2x8x128xf32> to vector<8x128xf32>
    %22 = arith.addf %19, %21 : vector<8x128xf32>
    %c0_20 = arith.constant 0 : index
    %c0_21 = arith.constant 0 : index
    %23 = vector.load %arg10[%c0_20, %c0_21] : memref<32x128xf32, #tpu.memory_space<vmem>>, vector<8x128xf32>
    tpu.vector_store %arg10[%c0_20, %c0_21], %22 {strides = array<i32>} : memref<32x128xf32, #tpu.memory_space<vmem>>, vector<8x128xf32>,
    %c0_i32_22 = arith.constant 0 : i32
    %24 = arith.cmpi eq, %arg0, %c0_i32_22 : i32
    %25 = arith.extui %24 : i1 to i32
    %c0_i32_23 = arith.constant 0 : i32
    %26 = arith.cmpi ne, %25, %c0_i32_23 : i32
    scf.if %26 {
      %c0_24 = arith.constant 0 : index
      %c0_25 = arith.constant 0 : index
      %27 = vector.load %arg8[%c0_24, %c0_25] : memref<32x128xf32, #tpu.memory_space<vmem>>, vector<32x128xf32>
      %28 = vector.shape_cast %27 : vector<32x128xf32> to vector<1x32x128xf32>
      %cst_26 = arith.constant dense<0.000000e+00> : vector<1xf32>
      %29 = vector.multi_reduction <add>, %28, %cst_26 [1, 2] : vector<1x32x128xf32> to vector<1xf32>
      %30 = vector.shape_cast %29 : vector<1xf32> to vector<1x1x1xf32>
      %31 = vector.extract %30[0, 0, 0] : f32 from vector<1x1x1xf32>
      %c0_27 = arith.constant 0 : index
      %c0_28 = arith.constant 0 : index
      %32 = memref.load %arg5[%c0_27, %c0_28] : memref<1x1xf32, #tpu.memory_space<smem>>
      memref.store %31, %arg5[%c0_27, %c0_28] : memref<1x1xf32, #tpu.memory_space<smem>>
      %c0_29 = arith.constant 0 : index
      %c0_30 = arith.constant 0 : index
      %33 = vector.load %arg9[%c0_29, %c0_30] : memref<32x128xf32, #tpu.memory_space<vmem>>, vector<32x128xf32>
      %34 = vector.shape_cast %33 : vector<32x128xf32> to vector<1x32x128xf32>
      %cst_31 = arith.constant dense<0.000000e+00> : vector<1xf32>
      %35 = vector.multi_reduction <add>, %34, %cst_31 [1, 2] : vector<1x32x128xf32> to vector<1xf32>
      %36 = vector.shape_cast %35 : vector<1xf32> to vector<1x1x1xf32>
      %37 = vector.extract %36[0, 0, 0] : f32 from vector<1x1x1xf32>
      %c0_32 = arith.constant 0 : index
      %c0_33 = arith.constant 0 : index
      %38 = memref.load %arg6[%c0_32, %c0_33] : memref<1x1xf32, #tpu.memory_space<smem>>
      memref.store %37, %arg6[%c0_32, %c0_33] : memref<1x1xf32, #tpu.memory_space<smem>>
      %c0_34 = arith.constant 0 : index
      %c0_35 = arith.constant 0 : index
      %39 = vector.load %arg10[%c0_34, %c0_35] : memref<32x128xf32, #tpu.memory_space<vmem>>, vector<32x128xf32>
      %40 = vector.shape_cast %39 : vector<32x128xf32> to vector<1x32x128xf32>
      %cst_36 = arith.constant dense<0.000000e+00> : vector<1xf32>
      %41 = vector.multi_reduction <add>, %40, %cst_36 [1, 2] : vector<1x32x128xf32> to vector<1xf32>
      %42 = vector.shape_cast %41 : vector<1xf32> to vector<1x1x1xf32>
      %43 = vector.extract %42[0, 0, 0] : f32 from vector<1x1x1xf32>
      %c0_37 = arith.constant 0 : index
      %c0_38 = arith.constant 0 : index
      %44 = memref.load %arg7[%c0_37, %c0_38] : memref<1x1xf32, #tpu.memory_space<smem>>
      memref.store %43, %arg7[%c0_37, %c0_38] : memref<1x1xf32, #tpu.memory_space<smem>>
    } else {
    }
    return
  }
  func.func @transform_0(%arg0: i32) -> (i32, i32) {
    %c0_i32 = arith.constant 0 : i32
    %c0_i32_0 = arith.constant 0 : i32
    return %arg0, %c0_i32 : i32, i32
  }
  func.func @transform_1(%arg0: i32) -> (i32, i32) {
    %c0_i32 = arith.constant 0 : i32
    %c0_i32_0 = arith.constant 0 : i32
    return %arg0, %c0_i32 : i32, i32
  }
  func.func @transform_2(%arg0: i32) -> (i32, i32) {
    %c0_i32 = arith.constant 0 : i32
    %c0_i32_0 = arith.constant 0 : i32
    return %arg0, %c0_i32 : i32, i32
  }
  func.func @transform_3(%arg0: i32) -> (i32, i32) {
    %c0_i32 = arith.constant 0 : i32
    %c0_i32_0 = arith.constant 0 : i32
    return %arg0, %c0_i32 : i32, i32
  }
  func.func @transform_4(%arg0: i32) -> (i32, i32) {
    %c0_i32 = arith.constant 0 : i32
    %c0_i32_0 = arith.constant 0 : i32
    %c0_i32_1 = arith.constant 0 : i32
    return %c0_i32, %c0_i32_0 : i32, i32
  }
  func.func @transform_5(%arg0: i32) -> (i32, i32) {
    %c0_i32 = arith.constant 0 : i32
    %c0_i32_0 = arith.constant 0 : i32
    %c0_i32_1 = arith.constant 0 : i32
    return %c0_i32, %c0_i32_0 : i32, i32
  }
  func.func @transform_6(%arg0: i32) -> (i32, i32) {
    %c0_i32 = arith.constant 0 : i32
    %c0_i32_0 = arith.constant 0 : i32
    %c0_i32_1 = arith.constant 0 : i32
    return %c0_i32, %c0_i32_0 : i32, i32
  }
}

</mosaic_0001>

<llo_original>
// kernel: tpu_custom_call.1
$region0: #{tpu_custom_call.1}
  #allocation0 [shape = 'u32[]', space=smem, size = 0x4, offset = 0x4, fixed_abs, tag = 'smem constant byte address 0x4 - core index']
  #allocation1 [shape = 'u32[144,128]{1,0:T(1,128)}', space=vmem, size = 0x12000, scoped, tag = 'internal scratch']
  #allocation2 [shape = 'f32[32,128]{1,0:T(8,128)}', space=vmem, size = 0x4000, scoped, tag = 'scratch operand']
  #allocation3 [shape = 'f32[32,128]{1,0:T(8,128)}', space=vmem, size = 0x4000, scoped, tag = 'scratch operand']
  #allocation4 [shape = 'f32[32,128]{1,0:T(8,128)}', space=vmem, size = 0x4000, scoped, tag = 'scratch operand']
  %s0 = inlined_call_operand.hbm [shape: f32[16,128], index: 0, kind: input, shape index: {}]
  %s1 = inlined_call_operand.hbm [shape: f32[16,128], index: 1, kind: input, shape index: {}]
  %s2 = inlined_call_operand.hbm [shape: f32[16,128], index: 2, kind: input, shape index: {}]
  %s3 = inlined_call_operand.hbm [shape: f32[16,128], index: 3, kind: input, shape index: {}]
  %s4 = inlined_call_operand.hbm [shape: f32[1,1], index: 4, kind: output, shape index: {0}]
  %s5 = inlined_call_operand.hbm [shape: f32[1,1], index: 5, kind: output, shape index: {1}]
  %s6 = inlined_call_operand.hbm [shape: f32[1,1], index: 6, kind: output, shape index: {2}]
  %7 = xla_tuple %s4, %s5, %s6
  %s8 = sld [smem:[#allocation0]]
  $region66: #{tpu_custom_call.1} parent=0
    _
  %s10 = ssub.s32 1, %s8
  %s11 = scalar_select 0, %s10, %s8
  $region1: #{tpu_custom_call.1} parent=0
    #allocation5 [shape = 'u8[8192]{0}', space=vmem, size = 0x2000, scoped, tag = 'input window, operand 0, single buffered']
    #allocation6 [shape = 's32[1]{0}', space=sflag, size = 0x4, scoped, tag = 'scoped memory for tpu_custom_call.1']
    #allocation7 [shape = 's32[1]{0}', space=sflag, size = 0x4, scoped, tag = 'scoped memory for tpu_custom_call.1']
    #allocation8 [shape = 'u8[8192]{0}', space=vmem, size = 0x2000, scoped, tag = 'input window, operand 1, single buffered']
    #allocation9 [shape = 's32[1]{0}', space=sflag, size = 0x4, scoped, tag = 'scoped memory for tpu_custom_call.1']
    #allocation10 [shape = 'u8[8192]{0}', space=vmem, size = 0x2000, scoped, tag = 'input window, operand 2, single buffered']
    #allocation11 [shape = 'u8[8192]{0}', space=vmem, size = 0x2000, scoped, tag = 'input window, operand 3, single buffered']
    #allocation12 [shape = 's32[1]{0}', space=sflag, size = 0x4, scoped, tag = 'scoped memory for tpu_custom_call.1']
    #allocation13 [shape = 'u8[512]{0}', space=smem, size = 0x200, scoped, tag = 'output window, operand 0, single buffered']
    #allocation14 [shape = 'u8[512]{0}', space=smem, size = 0x200, scoped, tag = 'output window, operand 1, single buffered']
    #allocation15 [shape = 's32[1]{0}', space=sflag, size = 0x4, scoped, tag = 'scoped memory for tpu_custom_call.1']
    #allocation16 [shape = 'u8[512]{0}', space=smem, size = 0x200, scoped, tag = 'output window, operand 2, single buffered']
    %12 = vsyncpa [#allocation6], 0
    %13 = vsyncpa [#allocation9], 0
    %14 = vsyncpa [#allocation12], 0
    %15 = vsyncpa [#allocation7], 0
    %16 = vsyncpa [#allocation15], 0
    // Predicated region
    $region2: #{tpu_custom_call.1} parent=1 // pred_check
      _
    $region3: #{tpu_custom_call.1} parent=1 // pred_check_branch
      %18 = sbr.rel (0) target = $region5
    $region4: #{tpu_custom_call.1} parent=1 // pred_region
      %s20 = ssub.s32 256, 256
      %21 = vsyncadd [#allocation6], %s20
      %s22 = sshll.u32 [#allocation5], 4
      %s23 = int_to_ptr.vmem [resolvable:$true] %s22
      %28 = dma.hbm_to_vmem [thread:$0]  %s0, 256, %s23, [#allocation6], 128, 128, 8
    $region5: #{tpu_custom_call.1} parent=1 // pred_fallthru
      _
    // Predicated region
    $region6: #{tpu_custom_call.1} parent=1 // pred_check
      _
    $region7: #{tpu_custom_call.1} parent=1 // pred_check_branch
      %30 = sbr.rel (0) target = $region9
    $region8: #{tpu_custom_call.1} parent=1 // pred_region
      %s32 = ssub.s32 256, 256
      %33 = vsyncadd [#allocation9], %s32
      %s34 = sshll.u32 [#allocation8], 4
      %s35 = int_to_ptr.vmem [resolvable:$true] %s34
      %40 = dma.hbm_to_vmem [thread:$0]  %s1, 256, %s35, [#allocation9], 128, 128, 8
    $region9: #{tpu_custom_call.1} parent=1 // pred_fallthru
      _
    // Predicated region
    $region10: #{tpu_custom_call.1} parent=1 // pred_check
      _
    $region11: #{tpu_custom_call.1} parent=1 // pred_check_branch
      %42 = sbr.rel (0) target = $region13
    $region12: #{tpu_custom_call.1} parent=1 // pred_region
      %s44 = ssub.s32 256, 256
      %45 = vsyncadd [#allocation9], %s44
      %s46 = sshll.u32 [#allocation10], 4
      %s47 = int_to_ptr.vmem [resolvable:$true] %s46
      %52 = dma.hbm_to_vmem [thread:$0]  %s2, 256, %s47, [#allocation9], 128, 128, 8
    $region13: #{tpu_custom_call.1} parent=1 // pred_fallthru
      _
    // Predicated region
    $region14: #{tpu_custom_call.1} parent=1 // pred_check
      _
    $region15: #{tpu_custom_call.1} parent=1 // pred_check_branch
      %54 = sbr.rel (0) target = $region17
    $region16: #{tpu_custom_call.1} parent=1 // pred_region
      %s56 = ssub.s32 256, 256
      %57 = vsyncadd [#allocation12], %s56
      %s58 = sshll.u32 [#allocation11], 4
      %s59 = int_to_ptr.vmem [resolvable:$true] %s58
      %64 = dma.hbm_to_vmem [thread:$0]  %s3, 256, %s59, [#allocation12], 128, 128, 8
    $region17: #{tpu_custom_call.1} parent=1 // pred_fallthru
      _
    // Predicated region
    $region18: #{tpu_custom_call.1} parent=1 // pred_check
      _
    $region19: #{tpu_custom_call.1} parent=1 // pred_check_branch
      %66 = sbr.rel (0) target = $region21
    $region20: #{tpu_custom_call.1} parent=1 // pred_region
      %67 = dma.done [#allocation6], 256
    $region21: #{tpu_custom_call.1} parent=1 // pred_fallthru
      _
    // Predicated region
    $region22: #{tpu_custom_call.1} parent=1 // pred_check
      _
    $region23: #{tpu_custom_call.1} parent=1 // pred_check_branch
      %69 = sbr.rel (0) target = $region25
    $region24: #{tpu_custom_call.1} parent=1 // pred_region
      %70 = dma.done [#allocation9], 256
    $region25: #{tpu_custom_call.1} parent=1 // pred_fallthru
      _
    // Predicated region
    $region26: #{tpu_custom_call.1} parent=1 // pred_check
      _
    $region27: #{tpu_custom_call.1} parent=1 // pred_check_branch
      %72 = sbr.rel (0) target = $region29
    $region28: #{tpu_custom_call.1} parent=1 // pred_region
      %73 = dma.done [#allocation9], 256
    $region29: #{tpu_custom_call.1} parent=1 // pred_fallthru
      _
    // Predicated region
    $region30: #{tpu_custom_call.1} parent=1 // pred_check
      _
    $region31: #{tpu_custom_call.1} parent=1 // pred_check_branch
      %75 = sbr.rel (0) target = $region33
    $region32: #{tpu_custom_call.1} parent=1 // pred_region
      %76 = dma.done [#allocation12], 256
    $region33: #{tpu_custom_call.1} parent=1 // pred_fallthru
      _
    %p77 = scmp.eq.s32.totalorder 0, 0
    // Predicated region
    $region34: #{tpu_custom_call.1} parent=1 // pred_check
      %p78 = pneg %p77
    $region35: #{tpu_custom_call.1} parent=1 // pred_check_branch
      %80 = sbr.rel (%p78) target = $region37
    $region36: #{tpu_custom_call.1} parent=1 // pred_region
      %81 = vst [vmem:[#allocation2] sm:$0xff] 0.0
      %82 = vst [vmem:[#allocation2 + $0x8] sm:$0xff] 0.0
      %83 = vst [vmem:[#allocation2 + $0x10] sm:$0xff] 0.0
      %84 = vst [vmem:[#allocation2 + $0x18] sm:$0xff] 0.0
      %85 = vst [vmem:[#allocation3] sm:$0xff] 0.0
      %86 = vst [vmem:[#allocation3 + $0x8] sm:$0xff] 0.0
      %87 = vst [vmem:[#allocation3 + $0x10] sm:$0xff] 0.0
      %88 = vst [vmem:[#allocation3 + $0x18] sm:$0xff] 0.0
      %89 = vst [vmem:[#allocation4] sm:$0xff] 0.0
      %90 = vst [vmem:[#allocation4 + $0x8] sm:$0xff] 0.0
      %91 = vst [vmem:[#allocation4 + $0x10] sm:$0xff] 0.0
      %92 = vst [vmem:[#allocation4 + $0x18] sm:$0xff] 0.0
    $region37: #{tpu_custom_call.1} parent=1 // pred_fallthru
      _
    %v93 = vld [vmem:[#allocation5] sm:$0xff]
    %v94 = vld [vmem:[#allocation5 + $0x8] sm:$0xff]
    %v95 = vld [vmem:[#allocation8] sm:$0xff]
    %v96 = vld [vmem:[#allocation8 + $0x8] sm:$0xff]
    %v97 = vsub.f32 %v93, %v95
    %v98 = vsub.f32 %v94, %v96
    %v99 = vand.u32 2147483647, %v97
    %v100 = vand.u32 2147483647, %v98
    %v101 = vld [vmem:[#allocation2] sm:$0xff]
    %v102 = vadd.f32 %v99, %v100
    %v103 = vadd.f32 %v101, %v102
    %104 = vst [vmem:[#allocation2] sm:$0xff] %v103
    %v105 = vld [vmem:[#allocation10] sm:$0xff]
    %v106 = vld [vmem:[#allocation10 + $0x8] sm:$0xff]
    %v107 = vld [vmem:[#allocation3] sm:$0xff]
    %v108 = vadd.f32 %v105, %v106
    %v109 = vadd.f32 %v107, %v108
    %110 = vst [vmem:[#allocation3] sm:$0xff] %v109
    %v111 = vld [vmem:[#allocation11] sm:$0xff]
    %v112 = vld [vmem:[#allocation11 + $0x8] sm:$0xff]
    %v113 = vld [vmem:[#allocation4] sm:$0xff]
    %v114 = vadd.f32 %v111, %v112
    %v115 = vadd.f32 %v113, %v114
    %116 = vst [vmem:[#allocation4] sm:$0xff] %v115
    // Predicated region
    $region38: #{tpu_custom_call.1} parent=1 // pred_check
      %p117 = pneg %p77
    $region39: #{tpu_custom_call.1} parent=1 // pred_check_branch
      %119 = sbr.rel (%p117) target = $region41
    $region40: #{tpu_custom_call.1} parent=1 // pred_region
      %v120 = vld [vmem:[#allocation2] sm:$0xff]
      %v121 = vld [vmem:[#allocation2 + $0x8] sm:$0xff]
      %v122 = vld [vmem:[#allocation2 + $0x10] sm:$0xff]
      %v123 = vld [vmem:[#allocation2 + $0x18] sm:$0xff]
      %v124 = vadd.f32 %v120, %v121
      %v125 = vadd.f32 %v124, %v122
      %v126 = vadd.f32 %v125, %v123
      %127 = vadd.xlane.f32.xlu0 %v126
      %v128 = vpop.xlane.xlu0 %127
      %v129 = vrot.slane %v128, 4
      %v130 = vadd.f32 %v128, %v129
      %v131 = vrot.slane %v130, 2
      %v132 = vadd.f32 %v130, %v131
      %v133 = vrot.slane %v132, 1
      %v134 = vadd.f32 %v132, %v133
      %s135 = vtos %v134
      %s136 = scalar_lea.smem [#allocation13], 0
      %137 = sst [smem:[%s136]] %s135
      %v138 = vld [vmem:[#allocation3] sm:$0xff]
      %v139 = vld [vmem:[#allocation3 + $0x8] sm:$0xff]
      %v140 = vld [vmem:[#allocation3 + $0x10] sm:$0xff]
      %v141 = vld [vmem:[#allocation3 + $0x18] sm:$0xff]
      %v142 = vadd.f32 %v138, %v139
      %v143 = vadd.f32 %v142, %v140
      %v144 = vadd.f32 %v143, %v141
      %145 = vadd.xlane.f32.xlu0 %v144
      %v146 = vpop.xlane.xlu0 %145
      %v147 = vrot.slane %v146, 4
      %v148 = vadd.f32 %v146, %v147
      %v149 = vrot.slane %v148, 2
      %v150 = vadd.f32 %v148, %v149
      %v151 = vrot.slane %v150, 1
      %v152 = vadd.f32 %v150, %v151
      %s153 = vtos %v152
      %s154 = scalar_lea.smem [#allocation14], 0
      %155 = sst [smem:[%s154]] %s153
      %v156 = vld [vmem:[#allocation4] sm:$0xff]
      %v157 = vld [vmem:[#allocation4 + $0x8] sm:$0xff]
      %v158 = vld [vmem:[#allocation4 + $0x10] sm:$0xff]
      %v159 = vld [vmem:[#allocation4 + $0x18] sm:$0xff]
      %v160 = vadd.f32 %v156, %v157
      %v161 = vadd.f32 %v160, %v158
      %v162 = vadd.f32 %v161, %v159
      %163 = vadd.xlane.f32.xlu0 %v162
      %v164 = vpop.xlane.xlu0 %163
      %v165 = vrot.slane %v164, 4
      %v166 = vadd.f32 %v164, %v165
      %v167 = vrot.slane %v166, 2
      %v168 = vadd.f32 %v166, %v167
      %v169 = vrot.slane %v168, 1
      %v170 = vadd.f32 %v168, %v169
      %s171 = vtos %v170
      %s172 = scalar_lea.smem [#allocation16], 0
      %173 = sst [smem:[%s172]] %s171
    $region41: #{tpu_custom_call.1} parent=1 // pred_fallthru
      _
    // Predicated region
    $region42: #{tpu_custom_call.1} parent=1 // pred_check
      _
    $region43: #{tpu_custom_call.1} parent=1 // pred_check_branch
      %175 = sbr.rel (0) target = $region45
    $region44: #{tpu_custom_call.1} parent=1 // pred_region
      %s177 = ssub.s32 16, 16
      %178 = vsyncadd [#allocation7], %s177
      %181 = dma.smem_to_hbm [#allocation13], 16, %s4, [#allocation7]
    $region45: #{tpu_custom_call.1} parent=1 // pred_fallthru
      _
    // Predicated region
    $region46: #{tpu_custom_call.1} parent=1 // pred_check
      _
    $region47: #{tpu_custom_call.1} parent=1 // pred_check_branch
      %183 = sbr.rel (0) target = $region49
    $region48: #{tpu_custom_call.1} parent=1 // pred_region
      %s185 = ssub.s32 16, 16
      %186 = vsyncadd [#allocation15], %s185
      %189 = dma.smem_to_hbm [#allocation14], 16, %s5, [#allocation15]
    $region49: #{tpu_custom_call.1} parent=1 // pred_fallthru
      _
    // Predicated region
    $region50: #{tpu_custom_call.1} parent=1 // pred_check
      _
    $region51: #{tpu_custom_call.1} parent=1 // pred_check_branch
      %191 = sbr.rel (0) target = $region53
    $region52: #{tpu_custom_call.1} parent=1 // pred_region
      %s193 = ssub.s32 16, 16
      %194 = vsyncadd [#allocation15], %s193
      %197 = dma.smem_to_hbm [#allocation16], 16, %s6, [#allocation15]
    $region53: #{tpu_custom_call.1} parent=1 // pred_fallthru
      _
    // Predicated region
    $region54: #{tpu_custom_call.1} parent=1 // pred_check
      _
    $region55: #{tpu_custom_call.1} parent=1 // pred_check_branch
      %199 = sbr.rel (0) target = $region57
    $region56: #{tpu_custom_call.1} parent=1 // pred_region
      %200 = dma.done [#allocation7], 16
    $region57: #{tpu_custom_call.1} parent=1 // pred_fallthru
      _
    // Predicated region
    $region58: #{tpu_custom_call.1} parent=1 // pred_check
      _
    $region59: #{tpu_custom_call.1} parent=1 // pred_check_branch
      %202 = sbr.rel (0) target = $region61
    $region60: #{tpu_custom_call.1} parent=1 // pred_region
      %203 = dma.done [#allocation15], 16
    $region61: #{tpu_custom_call.1} parent=1 // pred_fallthru
      _
    // Predicated region
    $region62: #{tpu_custom_call.1} parent=1 // pred_check
      _
    $region63: #{tpu_custom_call.1} parent=1 // pred_check_branch
      %205 = sbr.rel (0) target = $region65
    $region64: #{tpu_custom_call.1} parent=1 // pred_region
      %206 = dma.done [#allocation15], 16
    $region65: #{tpu_custom_call.1} parent=1 // pred_fallthru
      _
    %207 = sfence
    %208 = vsyncpa [#allocation6], 1
    %209 = vsyncpa [#allocation9], 1
    %210 = vsyncpa [#allocation12], 1
    %211 = vsyncpa [#allocation7], 1
    %212 = vsyncpa [#allocation15], 1

</llo_original>
